<compile_context>
chip_gen: v6e
topology: v6e:2x2x1
jax: 0.10.0
libtpu: 0.0.40
codegen_flags: <defaults>
</compile_context>

<pallas_src>
import math

import jax
import jax.numpy as jnp
from jax.experimental import pallas as pl
from jax.experimental.pallas import tpu as pltpu

_LANE = 128
_SUB = 8
_MAX_TILE_ROWS = 2048   # 2048 x 128 f32 = 1 MiB per input buffer
_OUTER = 2              # leading "parallel" axis -> 2 TensorCores on v7x


def _cdiv(a, b):
    return (a + b - 1) // b


def _round_up(x, m):
    return _cdiv(x, m) * m


def _wbce_kernel(x_ref, y_ref, w_ref, out_ref, acc_ref):
    i = pl.program_id(1)

    @pl.when(i == 0)
    def _():
        acc_ref[...] = jnp.zeros_like(acc_ref)

    x = x_ref[...].astype(jnp.float32)   # [tile_rows, 128]
    y = y_ref[...].astype(jnp.float32)   # [tile_rows, 128]

    # Numerically-stable BCE-with-logits (same formula PyTorch uses):
    #   max(x, 0) - x*y + log(1 + exp(-|x|))
    # Padded elements (logit = -1e9, label = 0) contribute exactly 0, so no mask.
    acc_ref[...] += jnp.maximum(x, 0.0) - x * y + jnp.log1p(jnp.exp(-jnp.abs(x)))

    @pl.when(i == pl.num_programs(1) - 1)
    def _():
        # Single epilogue pass: per-position class weights (already scaled by
        # 1/(B*C)) applied once to the accumulator, then one cross-lane reduce.
        partial_sum = jnp.sum(acc_ref[...] * w_ref[...])
        out_ref[...] = jnp.full(out_ref.shape, partial_sum, dtype=out_ref.dtype)


def weighted_bce_with_logits_loss(logits, labels, weights, *,
                                  max_tile_rows=_MAX_TILE_ROWS):
    """logits: [B, C], labels: [B, C], weights: [C] -> scalar f32 mean loss."""
    B, C = logits.shape
    N = B * C

    # Flat, contiguous, lane-dense view — no transpose.
    x = logits.reshape(-1)
    y = labels.reshape(-1)

    rows = _cdiv(N, _LANE)

    # tile_rows must be a multiple of 8 (sublane layout) and keep every tile's
    # flat start offset ≡ 0 (mod C) so the periodic class pattern lines up.
    cg = C // math.gcd(C, _LANE)
    row_mult = (_SUB * cg) // math.gcd(_SUB, cg)   # lcm(8, C / gcd(C, 128))

    # Balanced tiling: pick the number of tiles first, then size tiles to fit.
    n_tiles = max(_OUTER, _cdiv(rows, max_tile_rows))
    n_tiles = _round_up(n_tiles, _OUTER)
    tile_rows = _round_up(_cdiv(rows, n_tiles), row_mult)
    rows_pad = n_tiles * tile_rows
    n_pad = rows_pad * _LANE
    n_inner = n_tiles // _OUTER

    if n_pad != N:
        x = jnp.pad(x, (0, n_pad - N), constant_values=-1e9)  # exactly 0 loss
        y = jnp.pad(y, (0, n_pad - N), constant_values=0)
    x = x.reshape(rows_pad, _LANE)
    y = y.reshape(rows_pad, _LANE)

    # Lane-periodic per-class weight slab (class = flat_index mod C), resident
    # in VMEM across the whole grid, with the 1/(B*C) mean folded in.
    cls = jnp.arange(tile_rows * _LANE, dtype=jnp.int32) % C
    w_slab = (weights.astype(jnp.float32)[cls]
              * jnp.float32(1.0 / (B * C))).reshape(tile_rows, _LANE)

    out = pl.pallas_call(
        _wbce_kernel,
        out_shape=jax.ShapeDtypeStruct((_OUTER * _SUB, _LANE), jnp.float32),
        grid_spec=pltpu.PrefetchScalarGridSpec(
            num_scalar_prefetch=0,
            grid=(_OUTER, n_inner),
            in_specs=[
                pl.BlockSpec((tile_rows, _LANE), lambda o, i: (o * n_inner + i, 0)),
                pl.BlockSpec((tile_rows, _LANE), lambda o, i: (o * n_inner + i, 0)),
                pl.BlockSpec((tile_rows, _LANE), lambda o, i: (0, 0)),
            ],
            out_specs=pl.BlockSpec((_SUB, _LANE), lambda o, i: (o, 0)),
            scratch_shapes=[pltpu.VMEM((tile_rows, _LANE), jnp.float32)],
        ),
        compiler_params=pltpu.CompilerParams(
            dimension_semantics=("parallel", "arbitrary")),
    )(x, y, w_slab)

    # Sum the two per-core partials (each core broadcast its partial over its
    # own (8,128) output block).
    return out[0, 0] + out[_SUB, 0]


def _reference(logits, labels, weights):
    x = logits.astype(jnp.float32)
    y = labels.astype(jnp.float32)
    loss = jnp.maximum(x, 0.0) - x * y + jnp.log1p(jnp.exp(-jnp.abs(x)))
    return jnp.mean(loss * weights.reshape(1, -1).astype(jnp.float32))


if __name__ == "__main__":
    key = jax.random.PRNGKey(0)
    k1, k2, k3, k4 = jax.random.split(key, 4)

    # batch=8, 3 concept labels (Race, Religion, Gender)
    B, C = 8, 3
    logits = jax.random.normal(k1, (B, C), dtype=jnp.float32)
    labels = (jax.random.uniform(k2, (B, C)) > 0.5).astype(jnp.float32)
    weights = jnp.array([1.0, 2.0, 0.5], dtype=jnp.float32)

    out = jax.block_until_ready(
        weighted_bce_with_logits_loss(logits, labels, weights))
    ref = _reference(logits, labels, weights)
    assert jnp.allclose(out, ref, rtol=1e-5, atol=1e-5), (out, ref)

    # Multi-tile coverage: force tiny tiles so both outer halves run >1 inner
    # step, exercising accumulator init/accumulate/finalize and padding.
    B2 = 2500
    logits2 = jax.random.normal(k3, (B2, C), dtype=jnp.float32)
    labels2 = (jax.random.uniform(k4, (B2, C)) > 0.5).astype(jnp.float32)
    out2 = jax.block_until_ready(
        weighted_bce_with_logits_loss(logits2, labels2, weights,
                                      max_tile_rows=24))
    ref2 = _reference(logits2, labels2, weights)
    assert jnp.allclose(out2, ref2, rtol=1e-5, atol=1e-5), (out2, ref2)

    print("KERNEL_OK")
</pallas_src>

<mosaic_0001>
module attributes {stable_mosaic.version = 11 : i64} {
  func.func @_wbce_kernel(%arg0: i32, %arg1: i32, %arg2: memref<24x128xf32, #tpu.memory_space<vmem>>, %arg3: memref<24x128xf32, #tpu.memory_space<vmem>>, %arg4: memref<24x128xf32, #tpu.memory_space<vmem>>, %arg5: memref<8x128xf32, #tpu.memory_space<vmem>>, %arg6: memref<24x128xf32, #tpu.memory_space<vmem>>) attributes {dimension_semantics = [#tpu.dimension_semantics<parallel>, #tpu.dimension_semantics<arbitrary>], iteration_bounds = array<i64: 2, 1>, scalar_prefetch = 0 : i64, scratch_operands = 1 : i64, tpu.core_type = #tpu.core_type<tc>, window_params = [{transform_indices = @transform_0, window_bounds = array<i64: 24, 128>}, {transform_indices = @transform_1, window_bounds = array<i64: 24, 128>}, {pipeline_mode = #tpu.pipeline_mode<synchronous>, transform_indices = @transform_2, window_bounds = array<i64: 24, 128>}, {transform_indices = @transform_3, window_bounds = array<i64: 8, 128>}]} {
    %c0_i32 = arith.constant 0 : i32
    %0 = arith.cmpi eq, %arg1, %c0_i32 : i32
    %1 = arith.extui %0 : i1 to i32
    %c0_i32_0 = arith.constant 0 : i32
    %2 = arith.cmpi ne, %1, %c0_i32_0 : i32
    scf.if %2 {
      %cst_11 = arith.constant 0.000000e+00 : f32
      %21 = vector.broadcast %cst_11 : f32 to vector<24x128xf32>
      %c0_12 = arith.constant 0 : index
      %c0_13 = arith.constant 0 : index
      %22 = vector.load %arg6[%c0_12, %c0_13] : memref<24x128xf32, #tpu.memory_space<vmem>>, vector<24x128xf32>
      tpu.vector_store %arg6[%c0_12, %c0_13], %21 {strides = array<i32>} : memref<24x128xf32, #tpu.memory_space<vmem>>, vector<24x128xf32>,
    } else {
    }
    %c0 = arith.constant 0 : index
    %c0_1 = arith.constant 0 : index
    %3 = vector.load %arg2[%c0, %c0_1] : memref<24x128xf32, #tpu.memory_space<vmem>>, vector<24x128xf32>
    %c0_2 = arith.constant 0 : index
    %c0_3 = arith.constant 0 : index
    %4 = vector.load %arg3[%c0_2, %c0_3] : memref<24x128xf32, #tpu.memory_space<vmem>>, vector<24x128xf32>
    %c0_4 = arith.constant 0 : index
    %c0_5 = arith.constant 0 : index
    %5 = vector.load %arg6[%c0_4, %c0_5] : memref<24x128xf32, #tpu.memory_space<vmem>>, vector<24x128xf32>
    %cst = arith.constant 0.000000e+00 : f32
    %6 = vector.broadcast %cst : f32 to vector<24x128xf32>
    %7 = arith.maximumf %3, %6 : vector<24x128xf32>
    %8 = arith.mulf %3, %4 : vector<24x128xf32>
    %9 = arith.subf %7, %8 : vector<24x128xf32>
    %10 = math.absf %3 : vector<24x128xf32>
    %cst_6 = arith.constant 0.000000e+00 : f32
    %11 = vector.broadcast %cst_6 : f32 to vector<24x128xf32>
    %12 = arith.subf %11, %10 : vector<24x128xf32>
    %13 = math.exp %12 : vector<24x128xf32>
    %14 = math.log1p %13 : vector<24x128xf32>
    %15 = arith.addf %9, %14 : vector<24x128xf32>
    %16 = arith.addf %5, %15 : vector<24x128xf32>
    %c0_7 = arith.constant 0 : index
    %c0_8 = arith.constant 0 : index
    %17 = vector.load %arg6[%c0_7, %c0_8] : memref<24x128xf32, #tpu.memory_space<vmem>>, vector<24x128xf32>
    tpu.vector_store %arg6[%c0_7, %c0_8], %16 {strides = array<i32>} : memref<24x128xf32, #tpu.memory_space<vmem>>, vector<24x128xf32>,
    %c0_i32_9 = arith.constant 0 : i32
    %18 = arith.cmpi eq, %arg1, %c0_i32_9 : i32
    %19 = arith.extui %18 : i1 to i32
    %c0_i32_10 = arith.constant 0 : i32
    %20 = arith.cmpi ne, %19, %c0_i32_10 : i32
    scf.if %20 {
      %c0_11 = arith.constant 0 : index
      %c0_12 = arith.constant 0 : index
      %21 = vector.load %arg6[%c0_11, %c0_12] : memref<24x128xf32, #tpu.memory_space<vmem>>, vector<24x128xf32>
      %c0_13 = arith.constant 0 : index
      %c0_14 = arith.constant 0 : index
      %22 = vector.load %arg4[%c0_13, %c0_14] : memref<24x128xf32, #tpu.memory_space<vmem>>, vector<24x128xf32>
      %23 = arith.mulf %21, %22 : vector<24x128xf32>
      %24 = vector.shape_cast %23 : vector<24x128xf32> to vector<1x24x128xf32>
      %cst_15 = arith.constant dense<0.000000e+00> : vector<1xf32>
      %25 = vector.multi_reduction <add>, %24, %cst_15 [1, 2] : vector<1x24x128xf32> to vector<1xf32>
      %26 = vector.shape_cast %25 : vector<1xf32> to vector<1x1x1xf32>
      %27 = vector.extract %26[0, 0, 0] : f32 from vector<1x1x1xf32>
      %28 = vector.broadcast %27 : f32 to vector<8x128xf32>
      %c0_16 = arith.constant 0 : index
      %c0_17 = arith.constant 0 : index
      %29 = vector.load %arg5[%c0_16, %c0_17] : memref<8x128xf32, #tpu.memory_space<vmem>>, vector<8x128xf32>
      tpu.vector_store %arg5[%c0_16, %c0_17], %28 {strides = array<i32>} : memref<8x128xf32, #tpu.memory_space<vmem>>, vector<8x128xf32>,
    } else {
    }
    return
  }
  func.func @transform_0(%arg0: i32, %arg1: i32) -> (i32, i32) {
    %c1_i32 = arith.constant 1 : i32
    %0 = arith.muli %arg0, %c1_i32 : i32
    %1 = arith.addi %0, %arg1 : i32
    %c0_i32 = arith.constant 0 : i32
    %c0_i32_0 = arith.constant 0 : i32
    return %1, %c0_i32 : i32, i32
  }
  func.func @transform_1(%arg0: i32, %arg1: i32) -> (i32, i32) {
    %c1_i32 = arith.constant 1 : i32
    %0 = arith.muli %arg0, %c1_i32 : i32
    %1 = arith.addi %0, %arg1 : i32
    %c0_i32 = arith.constant 0 : i32
    %c0_i32_0 = arith.constant 0 : i32
    return %1, %c0_i32 : i32, i32
  }
  func.func @transform_2(%arg0: i32, %arg1: i32) -> (i32, i32) {
    %c0_i32 = arith.constant 0 : i32
    %c0_i32_0 = arith.constant 0 : i32
    %c0_i32_1 = arith.constant 0 : i32
    return %c0_i32, %c0_i32_0 : i32, i32
  }
  func.func @transform_3(%arg0: i32, %arg1: i32) -> (i32, i32) {
    %c0_i32 = arith.constant 0 : i32
    %c0_i32_0 = arith.constant 0 : i32
    return %arg0, %c0_i32 : i32, i32
  }
}

</mosaic_0001>

<llo_original>
// kernel: tpu_custom_call.1
$region0: #{tpu_custom_call.1}
  #allocation0 [shape = 'u32[]', space=smem, size = 0x4, offset = 0x4, fixed_abs, tag = 'smem constant byte address 0x4 - core index']
  #allocation1 [shape = 'u32[144,128]{1,0:T(1,128)}', space=vmem, size = 0x12000, scoped, tag = 'internal scratch']
  #allocation2 [shape = 'f32[24,128]{1,0:T(8,128)}', space=vmem, size = 0x3000, scoped, tag = 'scratch operand']
  %s0 = inlined_call_operand.hbm [shape: f32[48,128], index: 0, kind: input, shape index: {}]
  %s1 = inlined_call_operand.hbm [shape: f32[48,128], index: 1, kind: input, shape index: {}]
  %s2 = inlined_call_operand.hbm [shape: f32[24,128], index: 2, kind: input, shape index: {}]
  %s3 = inlined_call_operand.hbm [shape: f32[16,128], index: 3, kind: output, shape index: {}]
  %s4 = sld [smem:[#allocation0]]
  $region65: #{tpu_custom_call.1} parent=0
    _
  %s6 = ssub.s32 1, %s4
  %s7 = scalar_select 0, %s6, %s4
  $region1: #{tpu_custom_call.1} parent=0
    #allocation3 [shape = 'u8[24576]{0}', space=vmem, size = 0x6000, scoped, tag = 'input window, operand 0']
    #allocation4 [shape = 's32[2]{0}', space=sflag, size = 0x8, scoped, tag = 'scoped memory for tpu_custom_call.1']
    #allocation5 [shape = 's32[2]{0}', space=sflag, size = 0x8, scoped, tag = 'scoped memory for tpu_custom_call.1']
    #allocation6 [shape = 'u8[24576]{0}', space=vmem, size = 0x6000, scoped, tag = 'input window, operand 1']
    #allocation7 [shape = 's32[2]{0}', space=sflag, size = 0x8, scoped, tag = 'scoped memory for tpu_custom_call.1']
    #allocation8 [shape = 'u8[12288]{0}', space=vmem, size = 0x3000, scoped, tag = 'input window, operand 2, single buffered']
    #allocation9 [shape = 'u8[8192]{0}', space=vmem, size = 0x2000, scoped, tag = 'output window, operand 0']
    %8 = vsyncpa [#allocation4], 0
    %s9 = scalar_lea.sflag [#allocation4], 1
    %10 = vsyncpa %s9, 0
    %11 = vsyncpa [#allocation7], 0
    %s12 = scalar_lea.sflag [#allocation7], 1
    %13 = vsyncpa %s12, 0
    %14 = vsyncpa [#allocation5], 0
    %s15 = scalar_lea.sflag [#allocation5], 1
    %16 = vsyncpa %s15, 0
    loop: start=0, step=1, limit=4
    $region2: #{tpu_custom_call.1} parent=1 // loop_pre_header
      _
    $region3: #{tpu_custom_call.1} parent=1 // loop_header
      %s18 = sphi 0, %s22
      %p19 = scmp.ge.s32.totalorder %s18, 4
      %s25 = sphi 0, %s37
      %s26 = sphi 0, %s33
      %s27 = sphi 0, %s25
      %s28 = sphi 0, %s26
      %s29 = sphi 0, %s27
      %s30 = sphi 0, %s28
      %s42 = sphi 0, %s44
      %s45 = sphi 0, %s42
      %s46 = sphi 0, %s45
      %s62 = sphi 0, %s46
      %s70 = sphi 0, %s72
      %s73 = sphi 0, %s70
      %s74 = sphi 0, %s73
      %s90 = sphi 0, %s74
      %s94 = sphi 0, %s94
      %s96 = sphi 0, %s94
      %s97 = sphi 0, %s96
      %s111 = sphi 0, %s97
      %s117 = sphi 0, %s119
      %s120 = sphi 0, %s117
      %s121 = sphi 0, %s120
      %s137 = sphi 0, %s121
    $region4: #{tpu_custom_call.1} parent=1 // loop_header_branch
      %21 = sbr.rel (%p19) target = $region8
    $region5: #{tpu_custom_call.1} parent=1 // loop_body
      %s23 = ssub.s32 %s18, 1
      %s24 = ssub.s32 %s18, 2
      %s31 = sadd.s32 1, %s26
      %p32 = scmp.ge.s32.totalorder %s31, 1
      %s33 = scalar_select %p32, 0, %s31
      %s34 = sadd.s32 1, %s25
      %s35 = scalar_select %p32, %s34, %s25
      %p36 = scmp.ge.s32.totalorder %s35, 2
      %s37 = scalar_select %p36, 0, %s35
      %s38 = sadd.s32 %s25, %s26
      %s39 = sadd.s32 %s37, %s33
      %s40 = ssub.s32 %s38, %s39
      %p41 = scmp.eq.s32.totalorder %s40, 0
      %s43 = sadd.s32 %s42, 1
      %s44 = scalar_select %p41, %s42, %s43
      %p47 = pneg %p41
      %p48 = scmp.eq.s32.totalorder %s18, 1
      %p49 = por %p47, %p48
      %p50 = scmp.ne.s32.totalorder %s42, %s45
      %p51 = scmp.eq.s32.totalorder %s18, 0
      %p52 = por %p50, %p51
      %p53 = scmp.ne.s32.totalorder %s42, %s45
      %p54 = scmp.eq.s32.totalorder %s23, 1
      %p55 = por %p53, %p54
      %p56 = scmp.ne.s32.totalorder %s45, %s46
      %p57 = scmp.eq.s32.totalorder %s23, 0
      %p58 = por %p56, %p57
      %p59 = scmp.ne.s32.totalorder %s45, %s46
      %p60 = scmp.eq.s32.totalorder %s24, 1
      %p61 = por %p59, %p60
      %p63 = scmp.ne.s32.totalorder %s46, %s62
      %p64 = scmp.eq.s32.totalorder %s24, 0
      %p65 = por %p63, %p64
      %s66 = sadd.s32 %s25, %s26
      %s67 = sadd.s32 %s37, %s33
      %s68 = ssub.s32 %s66, %s67
      %p69 = scmp.eq.s32.totalorder %s68, 0
      %s71 = sadd.s32 %s70, 1
      %s72 = scalar_select %p69, %s70, %s71
      %p75 = pneg %p69
      %p76 = scmp.eq.s32.totalorder %s18, 1
      %p77 = por %p75, %p76
      %p78 = scmp.ne.s32.totalorder %s70, %s73
      %p79 = scmp.eq.s32.totalorder %s18, 0
      %p80 = por %p78, %p79
      %p81 = scmp.ne.s32.totalorder %s70, %s73
      %p82 = scmp.eq.s32.totalorder %s23, 1
      %p83 = por %p81, %p82
      %p84 = scmp.ne.s32.totalorder %s73, %s74
      %p85 = scmp.eq.s32.totalorder %s23, 0
      %p86 = por %p84, %p85
      %p87 = scmp.ne.s32.totalorder %s73, %s74
      %p88 = scmp.eq.s32.totalorder %s24, 1
      %p89 = por %p87, %p88
      %p91 = scmp.ne.s32.totalorder %s74, %s90
      %p92 = scmp.eq.s32.totalorder %s24, 0
      %p93 = por %p91, %p92
      %s95 = sadd.s32 %s94, 1
      %p98 = scmp.eq.s32.totalorder %s18, 1
      %p99 = scmp.ne.s32.totalorder %s94, %s96
      %p100 = scmp.eq.s32.totalorder %s18, 0
      %p101 = por %p99, %p100
      %p102 = scmp.ne.s32.totalorder %s94, %s96
      %p103 = scmp.eq.s32.totalorder %s23, 1
      %p104 = por %p102, %p103
      %p105 = scmp.ne.s32.totalorder %s96, %s97
      %p106 = scmp.eq.s32.totalorder %s23, 0
      %p107 = por %p105, %p106
      %p108 = scmp.ne.s32.totalorder %s96, %s97
      %p109 = scmp.eq.s32.totalorder %s24, 1
      %p110 = por %p108, %p109
      %p112 = scmp.ne.s32.totalorder %s97, %s111
      %p113 = scmp.eq.s32.totalorder %s24, 0
      %p114 = por %p112, %p113
      %s115 = ssub.s32 %s25, %s37
      %p116 = scmp.eq.s32.totalorder %s115, 0
      %s118 = sadd.s32 %s117, 1
      %s119 = scalar_select %p116, %s117, %s118
      %p122 = pneg %p116
      %p123 = scmp.eq.s32.totalorder %s18, 1
      %p124 = por %p122, %p123
      %p125 = scmp.ne.s32.totalorder %s117, %s120
      %p126 = scmp.eq.s32.totalorder %s18, 0
      %p127 = por %p125, %p126
      %p128 = scmp.ne.s32.totalorder %s117, %s120
      %p129 = scmp.eq.s32.totalorder %s23, 1
      %p130 = por %p128, %p129
      %p131 = scmp.ne.s32.totalorder %s120, %s121
      %p132 = scmp.eq.s32.totalorder %s23, 0
      %p133 = por %p131, %p132
      %p134 = scmp.ne.s32.totalorder %s120, %s121
      %p135 = scmp.eq.s32.totalorder %s24, 1
      %p136 = por %p134, %p135
      %p138 = scmp.ne.s32.totalorder %s121, %s137
      %p139 = scmp.eq.s32.totalorder %s24, 0
      %p140 = por %p138, %p139
      %p141 = scmp.le.s32.totalorder 1, %s18
      %p142 = scmp.lt.s32.totalorder %s18, 3
      %p143 = pnand %p141, %p142
      %p144 = pneg %p143
      // Predicated region
      $region9: #{tpu_custom_call.1} parent=5 // pred_check
        _
      $region10: #{tpu_custom_call.1} parent=5 // pred_check_branch
        %146 = sbr.rel (%p143) target = $region12
      $region11: #{tpu_custom_call.1} parent=5 // pred_region
        %s147 = ssub.s32 %s18, 1
        // Predicated region
        $region13: #{tpu_custom_call.1} parent=11 // pred_check
          %p148 = pneg %p107
        $region14: #{tpu_custom_call.1} parent=11 // pred_check_branch
          %150 = sbr.rel (%p148) target = $region16
        $region15: #{tpu_custom_call.1} parent=11 // pred_region
          %s152 = ssub.s32 384, 384
          %153 = vsyncadd [#allocation7], %s152
          %s154 = sshll.u32 [#allocation8], 4
          %s155 = int_to_ptr.vmem [resolvable:$true] %s154
          %160 = dma.hbm_to_vmem [thread:$0]  %s2, 384, %s155, [#allocation7], 128, 128, 8
        $region16: #{tpu_custom_call.1} parent=11 // pred_fallthru
          _
      $region12: #{tpu_custom_call.1} parent=5 // pred_fallthru
        _
      %p161 = scmp.lt.s32.totalorder %s18, 2
      // Predicated region
      $region17: #{tpu_custom_call.1} parent=5 // pred_check
        %p162 = pneg %p161
      $region18: #{tpu_custom_call.1} parent=5 // pred_check_branch
        %164 = sbr.rel (%p162) target = $region20
      $region19: #{tpu_custom_call.1} parent=5 // pred_region
        // Predicated region
        $region21: #{tpu_custom_call.1} parent=19 // pred_check
          %p165 = pneg %p52
        $region22: #{tpu_custom_call.1} parent=19 // pred_check_branch
          %167 = sbr.rel (%p165) target = $region24
        $region23: #{tpu_custom_call.1} parent=19 // pred_region
          %s168 = sand.u32 %s42, 1
          %s169 = scalar_lea.sflag [#allocation4], %s168
          %s170 = sand.u32 %s42, 1
          %s171 = smul.addr %s170, 24
          %s172 = scalar_lea.vmem [#allocation3], %s171
          %s173 = sadd.s32 %s25, %s26
          %s174 = smul.u32 3, %s173
          %s176 = ssub.s32 384, 384
          %177 = vsyncadd %s169, %s176
          %s178 = smul.addr %s174, 128
          %s179 = scalar_lea.hbm %s0, %s178
          %s180 = sshll.u32 %s172, 4
          %s181 = int_to_ptr.vmem [resolvable:$true] %s180
          %186 = dma.hbm_to_vmem [thread:$0]  %s179, 384, %s181, %s169, 128, 128, 8
        $region24: #{tpu_custom_call.1} parent=19 // pred_fallthru
          _
        // Predicated region
        $region25: #{tpu_custom_call.1} parent=19 // pred_check
          %p187 = pneg %p80
        $region26: #{tpu_custom_call.1} parent=19 // pred_check_branch
          %189 = sbr.rel (%p187) target = $region28
        $region27: #{tpu_custom_call.1} parent=19 // pred_region
          %s190 = sand.u32 %s18, 1
          %s191 = scalar_lea.sflag [#allocation7], %s190
          %s192 = sand.u32 %s70, 1
          %s193 = smul.addr %s192, 24
          %s194 = scalar_lea.vmem [#allocation6], %s193
          %s195 = sadd.s32 %s25, %s26
          %s196 = smul.u32 3, %s195
          %s198 = ssub.s32 384, 384
          %199 = vsyncadd %s191, %s198
          %s200 = smul.addr %s196, 128
          %s201 = scalar_lea.hbm %s1, %s200
          %s202 = sshll.u32 %s194, 4
          %s203 = int_to_ptr.vmem [resolvable:$true] %s202
          %208 = dma.hbm_to_vmem [thread:$0]  %s201, 384, %s203, %s191, 128, 128, 8
        $region28: #{tpu_custom_call.1} parent=19 // pred_fallthru
          _
      $region20: #{tpu_custom_call.1} parent=5 // pred_fallthru
        _
      %p209 = scmp.le.s32.totalorder 1, %s18
      %p210 = scmp.lt.s32.totalorder %s18, 3
      %p211 = pnand %p209, %p210
      %p212 = pneg %p211
      // Predicated region
      $region29: #{tpu_custom_call.1} parent=5 // pred_check
        _
      $region30: #{tpu_custom_call.1} parent=5 // pred_check_branch
        %214 = sbr.rel (%p211) target = $region32
      $region31: #{tpu_custom_call.1} parent=5 // pred_region
        %s215 = ssub.s32 %s18, 1
        %s216 = sand.u32 %s45, 1
        %s217 = scalar_lea.sflag [#allocation4], %s216
        %s218 = sand.u32 %s45, 1
        %s219 = smul.addr %s218, 24
        %s220 = scalar_lea.vmem [#allocation3], %s219
        // Predicated region
        $region33: #{tpu_custom_call.1} parent=31 // pred_check
          %p221 = pneg %p58
        $region34: #{tpu_custom_call.1} parent=31 // pred_check_branch
          %223 = sbr.rel (%p221) target = $region36
        $region35: #{tpu_custom_call.1} parent=31 // pred_region
          %224 = dma.done %s217, 384
        $region36: #{tpu_custom_call.1} parent=31 // pred_fallthru
          _
        %s225 = sand.u32 %s23, 1
        %s226 = scalar_lea.sflag [#allocation7], %s225
        %s227 = sand.u32 %s73, 1
        %s228 = smul.addr %s227, 24
        %s229 = scalar_lea.vmem [#allocation6], %s228
        // Predicated region
        $region37: #{tpu_custom_call.1} parent=31 // pred_check
          %p230 = pneg %p86
        $region38: #{tpu_custom_call.1} parent=31 // pred_check_branch
          %232 = sbr.rel (%p230) target = $region40
        $region39: #{tpu_custom_call.1} parent=31 // pred_region
          %233 = dma.done %s226, 384
        $region40: #{tpu_custom_call.1} parent=31 // pred_fallthru
          _
        // Predicated region
        $region41: #{tpu_custom_call.1} parent=31 // pred_check
          %p234 = pneg %p107
        $region42: #{tpu_custom_call.1} parent=31 // pred_check_branch
          %236 = sbr.rel (%p234) target = $region44
        $region43: #{tpu_custom_call.1} parent=31 // pred_region
          %237 = dma.done [#allocation7], 384
        $region44: #{tpu_custom_call.1} parent=31 // pred_fallthru
          _
        %s238 = sand.u32 %s45, 1
        %s239 = scalar_lea.sflag [#allocation4], %s238
        %s240 = sand.u32 %s45, 1
        %s241 = smul.addr %s240, 24
        %s242 = scalar_lea.vmem [#allocation3], %s241
        %p243 = pneg %p58
        %p244 = pneg %p55
        %s245 = sand.u32 %s23, 1
        %s246 = scalar_lea.sflag [#allocation7], %s245
        %s247 = sand.u32 %s73, 1
        %s248 = smul.addr %s247, 24
        %s249 = scalar_lea.vmem [#allocation6], %s248
        %p250 = pneg %p86
        %p251 = pneg %p83
        %p252 = pneg %p107
        %p253 = pneg %p104
        %p254 = pneg %p133
        %p255 = pneg %p130
        %s256 = sand.u32 %s120, 1
        %s257 = scalar_lea.sflag [#allocation5], %s256
        %s258 = sand.u32 %s120, 1
        %s259 = smul.addr %s258, 8
        %s260 = scalar_lea.vmem [#allocation9], %s259
        %s261 = sadd.s32 %s27, %s28
        %s262 = smul.u32 3, %s261
        %s263 = sadd.s32 %s27, %s28
        %s264 = smul.u32 3, %s263
        %p265 = scmp.eq.s32.totalorder %s28, 0
        // Predicated region
        $region45: #{tpu_custom_call.1} parent=31 // pred_check
          %p266 = pneg %p265
        $region46: #{tpu_custom_call.1} parent=31 // pred_check_branch
          %268 = sbr.rel (%p266) target = $region48
        $region47: #{tpu_custom_call.1} parent=31 // pred_region
          %269 = vst [vmem:[#allocation2] sm:$0xff] 0.0
          %270 = vst [vmem:[#allocation2 + $0x8] sm:$0xff] 0.0
          %271 = vst [vmem:[#allocation2 + $0x10] sm:$0xff] 0.0
        $region48: #{tpu_custom_call.1} parent=31 // pred_fallthru
          _
        %v272 = vld [vmem:[%s220] sm:$0xff]
        %v273 = vld [vmem:[%s220 + $0x8] sm:$0xff]
        %v274 = vld [vmem:[%s220 + $0x10] sm:$0xff]
        %v275 = vld [vmem:[%s229] sm:$0xff]
        %v276 = vld [vmem:[%s229 + $0x8] sm:$0xff]
        %v277 = vld [vmem:[%s229 + $0x10] sm:$0xff]
        %v278 = vld [vmem:[#allocation2] sm:$0xff]
        %v279 = vld [vmem:[#allocation2 + $0x8] sm:$0xff]
        %v280 = vld [vmem:[#allocation2 + $0x10] sm:$0xff]
        %v281 = vmax.f32 %v272, 0.0
        %v282 = vmax.f32 %v273, 0.0
        %v283 = vmax.f32 %v274, 0.0
        %v284 = vmul.f32 %v272, %v275
        %v285 = vmul.f32 %v273, %v276
        %v286 = vmul.f32 %v274, %v277
        %v287 = vsub.f32 %v281, %v284
        %v288 = vsub.f32 %v282, %v285
        %v289 = vsub.f32 %v283, %v286
        %v290 = vand.u32 2147483647, %v272
        %v291 = vand.u32 2147483647, %v273
        %v292 = vand.u32 2147483647, %v274
        %v293 = vsub.f32 0.0, %v290
        %v294 = vsub.f32 0.0, %v291
        %v295 = vsub.f32 0.0, %v292
        %v296 = vmul.f32 %v293, 1.442695
        %v297 = vpow.pop %v296
        %v298 = vmul.f32 %v294, 1.442695
        %v299 = vpow.pop %v298
        %v300 = vmul.f32 %v295, 1.442695
        %v301 = vpow.pop %v300
        %v302 = vadd.f32 %v297, 1.0
        %v303 = vlog2.pop %v302
        %v304 = vmul.f32 %v303, 0.6931472
        %v305 = vmul.f32 -0.5, %v297
        %v306 = vadd.f32 %v305, 1.0
        %v307 = vmul.f32 %v306, %v297
        %v308 = vand.u32 2147483647, %v297
        %vm309 = vcmp.lt.f32.partialorder %v308, 0.0004427343
        %v310 = vsel %vm309, %v307, %v304
        %v311 = vadd.f32 %v299, 1.0
        %v312 = vlog2.pop %v311
        %v313 = vmul.f32 %v312, 0.6931472
        %v314 = vmul.f32 -0.5, %v299
        %v315 = vadd.f32 %v314, 1.0
        %v316 = vmul.f32 %v315, %v299
        %v317 = vand.u32 2147483647, %v299
        %vm318 = vcmp.lt.f32.partialorder %v317, 0.0004427343
        %v319 = vsel %vm318, %v316, %v313
        %v320 = vadd.f32 %v301, 1.0
        %v321 = vlog2.pop %v320
        %v322 = vmul.f32 %v321, 0.6931472
        %v323 = vmul.f32 -0.5, %v301
        %v324 = vadd.f32 %v323, 1.0
        %v325 = vmul.f32 %v324, %v301
        %v326 = vand.u32 2147483647, %v301
        %vm327 = vcmp.lt.f32.partialorder %v326, 0.0004427343
        %v328 = vsel %vm327, %v325, %v322
        %v329 = vadd.f32 %v287, %v310
        %v330 = vadd.f32 %v288, %v319
        %v331 = vadd.f32 %v289, %v328
        %v332 = vadd.f32 %v278, %v329
        %v333 = vadd.f32 %v279, %v330
        %v334 = vadd.f32 %v280, %v331
        %335 = vst [vmem:[#allocation2] sm:$0xff] %v332
        %336 = vst [vmem:[#allocation2 + $0x8] sm:$0xff] %v333
        %337 = vst [vmem:[#allocation2 + $0x10] sm:$0xff] %v334
        // Predicated region
        $region49: #{tpu_custom_call.1} parent=31 // pred_check
          %p338 = pneg %p265
        $region50: #{tpu_custom_call.1} parent=31 // pred_check_branch
          %340 = sbr.rel (%p338) target = $region52
        $region51: #{tpu_custom_call.1} parent=31 // pred_region
          %v341 = vld [vmem:[#allocation2] sm:$0xff]
          %v342 = vld [vmem:[#allocation2 + $0x8] sm:$0xff]
          %v343 = vld [vmem:[#allocation2 + $0x10] sm:$0xff]
          %v344 = vld [vmem:[#allocation8] sm:$0xff]
          %v345 = vld [vmem:[#allocation8 + $0x8] sm:$0xff]
          %v346 = vld [vmem:[#allocation8 + $0x10] sm:$0xff]
          %v347 = vmul.f32 %v341, %v344
          %v348 = vmul.f32 %v342, %v345
          %v349 = vmul.f32 %v343, %v346
          %v350 = vadd.f32 %v347, %v348
          %v351 = vadd.f32 %v350, %v349
          %352 = vadd.xlane.f32.xlu0 %v351
          %v353 = vpop.xlane.xlu0 %352
          %v354 = vrot.slane %v353, 4
          %v355 = vadd.f32 %v353, %v354
          %v356 = vrot.slane %v355, 2
          %v357 = vadd.f32 %v355, %v356
          %v358 = vrot.slane %v357, 1
          %v359 = vadd.f32 %v357, %v358
          %s360 = vtos %v359
          %v361 = vstv %s360
          %362 = vst [vmem:[%s260] sm:$0xff] %v361
        $region52: #{tpu_custom_call.1} parent=31 // pred_fallthru
          _
        %s363 = sand.u32 %s120, 1
        %s364 = scalar_lea.sflag [#allocation5], %s363
        %s365 = sand.u32 %s120, 1
        %s366 = smul.addr %s365, 8
        %s367 = scalar_lea.vmem [#allocation9], %s366
        // Predicated region
        $region53: #{tpu_custom_call.1} parent=31 // pred_check
          %p368 = pneg %p130
        $region54: #{tpu_custom_call.1} parent=31 // pred_check_branch
          %370 = sbr.rel (%p368) target = $region56
        $region55: #{tpu_custom_call.1} parent=31 // pred_region
          %s372 = ssub.s32 128, 128
          %373 = vsyncadd %s364, %s372
          %s374 = smul.addr %s27, 128
          %s375 = scalar_lea.hbm %s3, %s374
          %s377 = sshll.u32 %s367, 4
          %s378 = int_to_ptr.vmem [resolvable:$true] %s377
          %380 = dma.vmem_to_hbm [thread:$0]  %s378, 128, %s375, %s364
        $region56: #{tpu_custom_call.1} parent=31 // pred_fallthru
          _
      $region32: #{tpu_custom_call.1} parent=5 // pred_fallthru
        _
      %p381 = scmp.le.s32.totalorder 2, %s18
      // Predicated region
      $region57: #{tpu_custom_call.1} parent=5 // pred_check
        %p382 = pneg %p381
      $region58: #{tpu_custom_call.1} parent=5 // pred_check_branch
        %384 = sbr.rel (%p382) target = $region60
      $region59: #{tpu_custom_call.1} parent=5 // pred_region
        %s385 = ssub.s32 %s18, 2
        // Predicated region
        $region61: #{tpu_custom_call.1} parent=59 // pred_check
          %p386 = pneg %p136
        $region62: #{tpu_custom_call.1} parent=59 // pred_check_branch
          %388 = sbr.rel (%p386) target = $region64
        $region63: #{tpu_custom_call.1} parent=59 // pred_region
          %s389 = sand.u32 %s121, 1
          %s390 = scalar_lea.sflag [#allocation5], %s389
          %s391 = sand.u32 %s121, 1
          %s392 = smul.addr %s391, 8
          %s393 = scalar_lea.vmem [#allocation9], %s392
          %394 = dma.done %s390, 128
        $region64: #{tpu_custom_call.1} parent=59 // pred_fallthru
          _
      $region60: #{tpu_custom_call.1} parent=5 // pred_fallthru
        _
    $region6: #{tpu_custom_call.1} parent=1 // loop_footer
      %s22 = sadd.s32 1, %s18
    $region7: #{tpu_custom_call.1} parent=1 // loop_footer_branch
      %17 = sbr.rel target = $region3
    $region8: #{tpu_custom_call.1} parent=1 // loop_exit
      _
    %395 = vsyncpa [#allocation4], 1
    %s396 = scalar_lea.sflag [#allocation4], 1
    %397 = vsyncpa %s396, 1
    %398 = vsyncpa [#allocation7], 1
    %s399 = scalar_lea.sflag [#allocation7], 1
    %400 = vsyncpa %s399, 1
    %401 = vsyncpa [#allocation5], 1
    %s402 = scalar_lea.sflag [#allocation5], 1
    %403 = vsyncpa %s402, 1

</llo_original>
